<compile_context>
chip_gen: v7x
topology: tpu7x:2x2x1
jax: 0.10.0
libtpu: 0.0.40
codegen_flags: <defaults>
</compile_context>

<pallas_src>
import functools

import numpy as np
import jax
import jax.numpy as jnp
from jax import lax
from jax.experimental import pallas as pl
from jax.experimental.pallas import tpu as pltpu

BN_EPS = 1e-5


def _round_up(x, m):
    return ((x + m - 1) // m) * m


def _vmem_limit_bytes(B, in_f, tile_n, mxu_itemsize):
    """Shape-derived VMEM budget with headroom, clamped to device capacity."""
    resident = B * in_f * mxu_itemsize                      # x (constant block)
    per_step = (2 * in_f * tile_n * mxu_itemsize            # w tile + w2 tile
                + 8 * tile_n * 4                            # packed epilogue rows
                + B * tile_n * 4)                           # output tile
    need = 2 * resident + 2 * per_step                      # double-buffer slack
    need = int(need * 1.25) + (2 << 20)
    cap = 100 << 20
    try:   # clamp to the real device VMEM (e.g. 64 MiB per TensorCore on v7x)
        cap = min(cap, int(pltpu.get_tpu_info().vmem_capacity_bytes) - (8 << 20))
    except Exception:
        pass
    return int(max(min(need, cap), 16 << 20))


def _splitresqu_kernel(cb_ref, w2b_ref, x_ref, w_ref, w2_ref, pack_ref, out_ref,
                       *, n_relu_tiles):
    """One TN-wide output-feature tile of the fused [relu | resqu] slab."""
    del w2b_ref                                   # only consumed by w2's index_map
    j = pl.program_id(0)
    is_resqu = cb_ref[j] >= n_relu_tiles          # SMEM scalar -> tile kind

    x = x_ref[...]                                # [B, In] bf16, resident

    b = pack_ref[0:1, :]                          # per-feature epilogue rows (f32)
    b2 = pack_ref[1:2, :]
    gamma = pack_ref[2:3, :]
    beta = pack_ref[3:4, :]

    # Fused linear over this tile's columns of [Wr | Wq] (bf16 MXU, f32 acc).
    y = jnp.dot(x, w_ref[...], preferred_element_type=jnp.float32) + b

    def _resqu_pre():
        # ReSqU: (x Wq + bq)^2 - ((x^2) Wq^2 + bq^2).  Wq^2 / bq^2 precomputed;
        # x^2 is recomputed here (VALU work hidden under the MXU) instead of
        # being a second resident activation in VMEM / a second HBM stream.
        x2 = x * x
        v = jnp.dot(x2, w2_ref[...], preferred_element_type=jnp.float32) + b2
        return y * y - v

    p = lax.cond(is_resqu, _resqu_pre, lambda: y)   # no scratch round-trip

    # BatchNorm1d (training): batch mean + biased variance, per feature (f32).
    mean = jnp.mean(p, axis=0, keepdims=True)
    centered = p - mean                              # reused for var + normalize
    var = jnp.mean(centered * centered, axis=0, keepdims=True)
    sn = centered * lax.rsqrt(var + BN_EPS) * gamma + beta

    def _bound():
        # BatchBound (polarization=0): divide by per-feature max |.| over batch.
        maxi = jnp.max(jnp.abs(sn), axis=0, keepdims=True)
        # Tiny floor only matters for exactly-zero feature columns (where the
        # reference would emit NaN) and for the zero-padded columns.
        inv = pl.reciprocal(jnp.maximum(maxi, 1e-30), approx=False)
        return sn * inv

    final = lax.cond(is_resqu, _bound, lambda: sn)
    out_ref[...] = jnp.maximum(final, 0.0).astype(out_ref.dtype)  # single vst pass


def prepare_params(w_relu, b_relu, w_resqu, b_resqu, g1, be1, g2, be2,
                   *, tile_n=256, mxu_dtype=jnp.bfloat16):
    """One-time parameter prep (do NOT redo per forward call).

    Builds: the fused bf16 [Wr | Wq] slab ([in, out], each half zero-padded to a
    multiple of tile_n), a resqu-only bf16 Wq^2 slab, a packed (8, total) f32
    array of per-feature epilogue vectors, and the interleaved grid-order /
    w2-block scalar-prefetch tables.
    """
    in_f = w_relu.shape[1]
    relu_f = w_relu.shape[0]
    resqu_f = 0 if w_resqu is None else w_resqu.shape[0]
    relu_pad = _round_up(relu_f, tile_n)
    resqu_pad = _round_up(resqu_f, tile_n) if resqu_f > 0 else 0
    total = relu_pad + resqu_pad
    n_relu_tiles = relu_pad // tile_n
    n_resqu_tiles = resqu_pad // tile_n

    w_cat = np.zeros((in_f, total), np.float32)
    w_cat[:, :relu_f] = np.asarray(w_relu, np.float32).T

    # rows: 0 = bias, 1 = bias^2 (resqu), 2 = BN gamma, 3 = BN beta, 4-7 unused.
    pack = np.zeros((8, total), np.float32)
    pack[0, :relu_f] = np.asarray(b_relu, np.float32)
    pack[2, :relu_f] = np.asarray(g1, np.float32)
    pack[3, :relu_f] = np.asarray(be1, np.float32)

    # Squared resqu weights stored ONLY for the resqu columns (at least one
    # block so the BlockSpec stays valid when resqu_f == 0).
    w2 = np.zeros((in_f, max(resqu_pad, tile_n)), np.float32)

    if resqu_f > 0:
        wq_t = np.asarray(w_resqu, np.float32).T
        bq = np.asarray(b_resqu, np.float32)
        sl = slice(relu_pad, relu_pad + resqu_f)
        w_cat[:, sl] = wq_t
        pack[0, sl] = bq
        pack[1, sl] = bq * bq
        pack[2, sl] = np.asarray(g2, np.float32)
        pack[3, sl] = np.asarray(be2, np.float32)
        w2[:, :resqu_f] = wq_t * wq_t

    # Grid order: interleave relu / resqu tiles so a contiguous megacore split
    # (v7x: 2 TensorCores) gets a balanced mix of 1-matmul and 2-matmul tiles.
    relu_ids = list(range(n_relu_tiles))
    resqu_ids = list(range(n_relu_tiles, n_relu_tiles + n_resqu_tiles))
    order = []
    i = r = 0
    while i < len(relu_ids) or r < len(resqu_ids):
        if r < len(resqu_ids):
            order.append(resqu_ids[r]); r += 1
        if i < len(relu_ids):
            order.append(relu_ids[i]); i += 1
    col_blocks = np.asarray(order, np.int32)

    # w2 block per grid step = block of the most recent resqu tile, so relu
    # steps keep the same block index -> Pallas skips the (unused) w2 re-DMA.
    w2_blocks = np.zeros_like(col_blocks)
    last = 0
    for pos, cb in enumerate(order):
        if cb >= n_relu_tiles:
            last = cb - n_relu_tiles
        w2_blocks[pos] = last

    params = (jnp.asarray(w_cat, mxu_dtype), jnp.asarray(w2, mxu_dtype),
              jnp.asarray(pack, jnp.float32),
              jnp.asarray(col_blocks), jnp.asarray(w2_blocks))
    meta = dict(in_f=in_f, relu_f=relu_f, resqu_f=resqu_f,
                relu_pad=relu_pad, resqu_pad=resqu_pad, tile_n=tile_n,
                n_relu_tiles=n_relu_tiles, n_tiles=len(order),
                mxu_dtype=mxu_dtype)
    return params, meta


def split_resqu_linear(x, params, meta):
    """x: [B, in_features] -> [B, relu_features + resqu_features] (f32)."""
    w_cat, w2_cat, pack, col_blocks, w2_blocks = params
    B = x.shape[0]
    in_f = meta["in_f"]
    tn = meta["tile_n"]
    relu_pad, resqu_pad = meta["relu_pad"], meta["resqu_pad"]
    total = relu_pad + resqu_pad
    n_tiles = meta["n_tiles"]
    n_relu_tiles = meta["n_relu_tiles"]
    mxu_dtype = meta["mxu_dtype"]
    itemsize = jnp.dtype(mxu_dtype).itemsize

    # bf16 activations halve the resident VMEM footprint and the HBM read of x;
    # all accumulation / BN / bound math stays f32 inside the kernel.
    x_mxu = x.astype(mxu_dtype)

    x_map = lambda j, cb, w2b: (0, 0)          # resident: block never changes
    col_map = lambda j, cb, w2b: (0, cb[j])    # interleaved column block order
    w2_map = lambda j, cb, w2b: (0, w2b[j])    # holds last resqu block on relu steps

    out = pl.pallas_call(
        functools.partial(_splitresqu_kernel, n_relu_tiles=n_relu_tiles),
        out_shape=jax.ShapeDtypeStruct((B, total), jnp.float32),
        grid_spec=pltpu.PrefetchScalarGridSpec(
            num_scalar_prefetch=2,
            grid=(n_tiles,),
            in_specs=[
                pl.BlockSpec((B, in_f), x_map),      # x (bf16), resident
                pl.BlockSpec((in_f, tn), col_map),   # [Wr | Wq] tile (bf16)
                pl.BlockSpec((in_f, tn), w2_map),    # Wq^2 tile (bf16, resqu-only)
                pl.BlockSpec((8, tn), col_map),      # packed [b; b^2; gamma; beta]
            ],
            out_specs=pl.BlockSpec((B, tn), col_map),  # fused [relu | resqu] slab
        ),
        compiler_params=pltpu.CompilerParams(
            dimension_semantics=("parallel",),         # independent tiles
            vmem_limit_bytes=_vmem_limit_bytes(B, in_f, tn, itemsize),
        ),
    )(col_blocks, w2_blocks, x_mxu, w_cat, w2_cat, pack)

    relu_f, resqu_f = meta["relu_f"], meta["resqu_f"]
    if relu_f == relu_pad and resqu_f == resqu_pad:
        return out                                     # already lane-aligned
    if resqu_f == 0:
        return out[:, :relu_f]
    # Strip zero-padding (disappears when feature counts are multiples of tile_n,
    # which is the recommended production configuration).
    return jnp.concatenate(
        [out[:, :relu_f], out[:, relu_pad:relu_pad + resqu_f]], axis=1)


def _reference(x, w_relu, b_relu, w_resqu, b_resqu, g1, be1, g2, be2,
               mxu_dtype=jnp.bfloat16):
    """Pure-JAX reference emulating the kernel's bf16 MXU operand quantization
    (f32 accumulation and f32 epilogue, like the kernel)."""
    q = lambda a: a.astype(mxu_dtype).astype(jnp.float32)
    hi = jax.lax.Precision.HIGHEST

    def bn(y, g, b):
        m = jnp.mean(y, axis=0, keepdims=True)
        v = jnp.mean((y - m) ** 2, axis=0, keepdims=True)
        return (y - m) / jnp.sqrt(v + BN_EPS) * g + b

    xq = q(x)
    h = bn(jnp.dot(xq, q(w_relu.T), precision=hi) + b_relu, g1, be1)
    x2q = q(xq * xq)
    z = (jnp.dot(xq, q(w_resqu.T), precision=hi) + b_resqu) ** 2
    v = jnp.dot(x2q, q((w_resqu ** 2).T), precision=hi) + b_resqu ** 2
    s = bn(z - v, g2, be2)
    s = s / jnp.max(jnp.abs(s), axis=0, keepdims=True)
    return jnp.maximum(jnp.concatenate([h, s], axis=1), 0.0)


if __name__ == "__main__":
    B, in_features, relu_features, resqu_features = 8, 32, 16, 16

    key = jax.random.PRNGKey(0)
    kx, k1, k2, k3, k4 = jax.random.split(key, 5)

    x = jax.random.normal(kx, (B, in_features), jnp.float32)

    # Deterministic parameter init (mimicking PyTorch shapes / rough scales).
    bound_r = 1.0 / jnp.sqrt(in_features)
    w_relu = jax.random.uniform(k1, (relu_features, in_features), jnp.float32,
                                -bound_r, bound_r)
    b_relu = jax.random.uniform(k2, (relu_features,), jnp.float32,
                                -bound_r, bound_r)
    xav = 0.2 * jnp.sqrt(6.0 / (in_features + resqu_features))   # xavier(0.2)
    w_resqu = jax.random.uniform(k3, (resqu_features, in_features), jnp.float32,
                                 -xav, xav)
    b_resqu = jax.random.uniform(k4, (resqu_features,), jnp.float32,
                                 -bound_r, bound_r)
    # BatchNorm affine params at PyTorch init: gamma=1, beta=0.
    g1 = jnp.ones((relu_features,), jnp.float32)
    be1 = jnp.zeros((relu_features,), jnp.float32)
    g2 = jnp.ones((resqu_features,), jnp.float32)
    be2 = jnp.zeros((resqu_features,), jnp.float32)

    params, meta = prepare_params(w_relu, b_relu, w_resqu, b_resqu,
                                  g1, be1, g2, be2, tile_n=256)

    out = split_resqu_linear(x, params, meta)
    out = jax.block_until_ready(out)

    ref = _reference(x, w_relu, b_relu, w_resqu, b_resqu, g1, be1, g2, be2)
    assert out.shape == (B, relu_features + resqu_features)
    assert bool(jnp.all(jnp.isfinite(out)))
    assert jnp.allclose(out, ref, rtol=5e-3, atol=5e-3)

    print("KERNEL_OK")
</pallas_src>

<mosaic_0001>
module attributes {stable_mosaic.version = 11 : i64} {
  func.func @_splitresqu_kernel(%arg0: i32, %arg1: memref<2xi32, #tpu.memory_space<smem>>, %arg2: memref<2xi32, #tpu.memory_space<smem>>, %arg3: memref<8x32xbf16, #tpu.memory_space<vmem>>, %arg4: memref<32x256xbf16, #tpu.memory_space<vmem>>, %arg5: memref<32x256xbf16, #tpu.memory_space<vmem>>, %arg6: memref<8x256xf32, #tpu.memory_space<vmem>>, %arg7: memref<8x256xf32, #tpu.memory_space<vmem>>) attributes {dimension_semantics = [#tpu.dimension_semantics<parallel>], iteration_bounds = array<i64: 2>, scalar_prefetch = 2 : i64, scratch_operands = 0 : i64, tpu.core_type = #tpu.core_type<tc>, window_params = [{pipeline_mode = #tpu.pipeline_mode<synchronous>, transform_indices = @transform_0, window_bounds = array<i64: 8, 32>}, {transform_indices = @transform_1, window_bounds = array<i64: 32, 256>}, {transform_indices = @transform_2, window_bounds = array<i64: 32, 256>}, {transform_indices = @transform_3, window_bounds = array<i64: 8, 256>}, {transform_indices = @transform_4, window_bounds = array<i64: 8, 256>}]} {
    %0 = arith.index_cast %arg0 : i32 to index
    %1 = memref.load %arg1[%0] : memref<2xi32, #tpu.memory_space<smem>>
    %c1_i32 = arith.constant 1 : i32
    %2 = arith.cmpi sge, %1, %c1_i32 : i32
    %c0 = arith.constant 0 : index
    %c0_0 = arith.constant 0 : index
    %3 = vector.load %arg3[%c0, %c0_0] : memref<8x32xbf16, #tpu.memory_space<vmem>>, vector<8x32xbf16>
    %c0_1 = arith.constant 0 : index
    %c0_2 = arith.constant 0 : index
    %4 = vector.load %arg6[%c0_1, %c0_2] : memref<8x256xf32, #tpu.memory_space<vmem>>, vector<1x256xf32>
    %c1 = arith.constant 1 : index
    %c0_3 = arith.constant 0 : index
    %5 = vector.load %arg6[%c1, %c0_3] : memref<8x256xf32, #tpu.memory_space<vmem>>, vector<1x256xf32>
    %c2 = arith.constant 2 : index
    %c0_4 = arith.constant 0 : index
    %6 = vector.load %arg6[%c2, %c0_4] : memref<8x256xf32, #tpu.memory_space<vmem>>, vector<1x256xf32>
    %c3 = arith.constant 3 : index
    %c0_5 = arith.constant 0 : index
    %7 = vector.load %arg6[%c3, %c0_5] : memref<8x256xf32, #tpu.memory_space<vmem>>, vector<1x256xf32>
    %c0_6 = arith.constant 0 : index
    %c0_7 = arith.constant 0 : index
    %8 = vector.load %arg4[%c0_6, %c0_7] : memref<32x256xbf16, #tpu.memory_space<vmem>>, vector<32x256xbf16>
    %cst = arith.constant dense<0.000000e+00> : vector<8x256xf32>
    %9 = tpu.matmul %3, %8, %cst {dimension_numbers = #tpu.dot_dimension_numbers<[1], [0], [0], [1], [0, 0, 1, 1], [], []>} : vector<8x32xbf16>, vector<32x256xbf16>, vector<8x256xf32> -> vector<8x256xf32>
    %10 = vector.broadcast %4 : vector<1x256xf32> to vector<8x256xf32>
    %11 = arith.addf %9, %10 : vector<8x256xf32>
    %12 = arith.extui %2 : i1 to i32
    %c0_i32 = arith.constant 0 : i32
    %13 = arith.cmpi ne, %12, %c0_i32 : i32
    %14 = scf.if %13 -> (vector<8x256xf32>) {
      %41 = arith.mulf %3, %3 : vector<8x32xbf16>
      %c0_17 = arith.constant 0 : index
      %c0_18 = arith.constant 0 : index
      %42 = vector.load %arg5[%c0_17, %c0_18] : memref<32x256xbf16, #tpu.memory_space<vmem>>, vector<32x256xbf16>
      %cst_19 = arith.constant dense<0.000000e+00> : vector<8x256xf32>
      %43 = tpu.matmul %41, %42, %cst_19 {dimension_numbers = #tpu.dot_dimension_numbers<[1], [0], [0], [1], [0, 0, 1, 1], [], []>} : vector<8x32xbf16>, vector<32x256xbf16>, vector<8x256xf32> -> vector<8x256xf32>
      %44 = vector.broadcast %5 : vector<1x256xf32> to vector<8x256xf32>
      %45 = arith.addf %43, %44 : vector<8x256xf32>
      %46 = arith.mulf %11, %11 : vector<8x256xf32>
      %47 = arith.subf %46, %45 : vector<8x256xf32>
      scf.yield %47 : vector<8x256xf32>
    } else {
      scf.yield %11 : vector<8x256xf32>
    }
    %cst_8 = arith.constant dense<0.000000e+00> : vector<256xf32>
    %15 = vector.multi_reduction <add>, %14, %cst_8 [0] : vector<8x256xf32> to vector<256xf32>
    %16 = vector.shape_cast %15 : vector<256xf32> to vector<1x256xf32>
    %cst_9 = arith.constant 8.000000e+00 : f32
    %17 = vector.broadcast %cst_9 : f32 to vector<1x256xf32>
    %18 = arith.divf %16, %17 : vector<1x256xf32>
    %19 = vector.broadcast %18 : vector<1x256xf32> to vector<8x256xf32>
    %20 = arith.subf %14, %19 : vector<8x256xf32>
    %21 = arith.mulf %20, %20 : vector<8x256xf32>
    %cst_10 = arith.constant dense<0.000000e+00> : vector<256xf32>
    %22 = vector.multi_reduction <add>, %21, %cst_10 [0] : vector<8x256xf32> to vector<256xf32>
    %23 = vector.shape_cast %22 : vector<256xf32> to vector<1x256xf32>
    %cst_11 = arith.constant 8.000000e+00 : f32
    %24 = vector.broadcast %cst_11 : f32 to vector<1x256xf32>
    %25 = arith.divf %23, %24 : vector<1x256xf32>
    %cst_12 = arith.constant 9.99999974E-6 : f32
    %26 = vector.broadcast %cst_12 : f32 to vector<1x256xf32>
    %27 = arith.addf %25, %26 : vector<1x256xf32>
    %28 = math.rsqrt %27 : vector<1x256xf32>
    %29 = vector.broadcast %28 : vector<1x256xf32> to vector<8x256xf32>
    %30 = arith.mulf %20, %29 : vector<8x256xf32>
    %31 = vector.broadcast %6 : vector<1x256xf32> to vector<8x256xf32>
    %32 = arith.mulf %30, %31 : vector<8x256xf32>
    %33 = vector.broadcast %7 : vector<1x256xf32> to vector<8x256xf32>
    %34 = arith.addf %32, %33 : vector<8x256xf32>
    %35 = arith.extui %2 : i1 to i32
    %c0_i32_13 = arith.constant 0 : i32
    %36 = arith.cmpi ne, %35, %c0_i32_13 : i32
    %37 = scf.if %36 -> (vector<8x256xf32>) {
      %41 = math.absf %34 : vector<8x256xf32>
      %cst_17 = arith.constant dense<0xFF800000> : vector<256xf32>
      %42 = vector.multi_reduction <maximumf>, %41, %cst_17 [0] : vector<8x256xf32> to vector<256xf32>
      %43 = vector.shape_cast %42 : vector<256xf32> to vector<1x256xf32>
      %cst_18 = arith.constant 1.000000e-30 : f32
      %44 = vector.broadcast %cst_18 : f32 to vector<1x256xf32>
      %45 = arith.maximumf %43, %44 : vector<1x256xf32>
      %46 = tpu.reciprocal %45 : vector<1x256xf32> -> vector<1x256xf32>
      %47 = vector.broadcast %46 : vector<1x256xf32> to vector<8x256xf32>
      %48 = arith.mulf %34, %47 : vector<8x256xf32>
      scf.yield %48 : vector<8x256xf32>
    } else {
      scf.yield %34 : vector<8x256xf32>
    }
    %cst_14 = arith.constant 0.000000e+00 : f32
    %38 = vector.broadcast %cst_14 : f32 to vector<8x256xf32>
    %39 = arith.maximumf %37, %38 : vector<8x256xf32>
    %c0_15 = arith.constant 0 : index
    %c0_16 = arith.constant 0 : index
    %40 = vector.load %arg7[%c0_15, %c0_16] : memref<8x256xf32, #tpu.memory_space<vmem>>, vector<8x256xf32>
    tpu.vector_store %arg7[%c0_15, %c0_16], %39 {strides = array<i32>} : memref<8x256xf32, #tpu.memory_space<vmem>>, vector<8x256xf32>,
    return
  }
  func.func @transform_0(%arg0: i32, %arg1: memref<2xi32, #tpu.memory_space<smem>>, %arg2: memref<2xi32, #tpu.memory_space<smem>>) -> (i32, i32) {
    %c0_i32 = arith.constant 0 : i32
    %c0_i32_0 = arith.constant 0 : i32
    %c0_i32_1 = arith.constant 0 : i32
    return %c0_i32, %c0_i32_0 : i32, i32
  }
  func.func @transform_1(%arg0: i32, %arg1: memref<2xi32, #tpu.memory_space<smem>>, %arg2: memref<2xi32, #tpu.memory_space<smem>>) -> (i32, i32) {
    %0 = arith.index_cast %arg0 : i32 to index
    %1 = memref.load %arg1[%0] : memref<2xi32, #tpu.memory_space<smem>>
    %c0_i32 = arith.constant 0 : i32
    %c0_i32_0 = arith.constant 0 : i32
    return %c0_i32, %1 : i32, i32
  }
  func.func @transform_2(%arg0: i32, %arg1: memref<2xi32, #tpu.memory_space<smem>>, %arg2: memref<2xi32, #tpu.memory_space<smem>>) -> (i32, i32) {
    %0 = arith.index_cast %arg0 : i32 to index
    %1 = memref.load %arg2[%0] : memref<2xi32, #tpu.memory_space<smem>>
    %c0_i32 = arith.constant 0 : i32
    %c0_i32_0 = arith.constant 0 : i32
    return %c0_i32, %1 : i32, i32
  }
  func.func @transform_3(%arg0: i32, %arg1: memref<2xi32, #tpu.memory_space<smem>>, %arg2: memref<2xi32, #tpu.memory_space<smem>>) -> (i32, i32) {
    %0 = arith.index_cast %arg0 : i32 to index
    %1 = memref.load %arg1[%0] : memref<2xi32, #tpu.memory_space<smem>>
    %c0_i32 = arith.constant 0 : i32
    %c0_i32_0 = arith.constant 0 : i32
    return %c0_i32, %1 : i32, i32
  }
  func.func @transform_4(%arg0: i32, %arg1: memref<2xi32, #tpu.memory_space<smem>>, %arg2: memref<2xi32, #tpu.memory_space<smem>>) -> (i32, i32) {
    %0 = arith.index_cast %arg0 : i32 to index
    %1 = memref.load %arg1[%0] : memref<2xi32, #tpu.memory_space<smem>>
    %c0_i32 = arith.constant 0 : i32
    %c0_i32_0 = arith.constant 0 : i32
    return %c0_i32, %1 : i32, i32
  }
}

</mosaic_0001>

<llo_original>
// kernel: tpu_custom_call.1
$region0: #{tpu_custom_call.1}
  #allocation0 [shape = 'u32[]', space=smem, size = 0x4, offset = 0x4, fixed_abs, tag = 'smem constant byte address 0x4 - core index']
  #allocation1 [shape = 'u32[144,128]{1,0:T(1,128)}', space=vmem, size = 0x12000, scoped, tag = 'internal scratch']
  #allocation2 [shape = 's32[1]{0}', space=sflag, size = 0x4, scoped, tag = 'scoped memory for tpu_custom_call.1']
  #allocation3 [shape = 'u8[512]{0}', space=smem, size = 0x200, scoped, tag = 'prefetched SMEM operand 0']
  #allocation4 [shape = 'u8[512]{0}', space=smem, size = 0x200, scoped, tag = 'prefetched SMEM operand 1']
  %s0 = inlined_call_operand.hbm [shape: s32[2], index: 0, kind: input, shape index: {}]
  %s1 = inlined_call_operand.vmem [shape: s32[2], index: 1, kind: input, shape index: {}]
  %s2 = inlined_call_operand.vmem [shape: bf16[8,32], index: 2, kind: input, shape index: {}]
  %s3 = inlined_call_operand.hbm [shape: bf16[32,512], index: 3, kind: input, shape index: {}]
  %s4 = inlined_call_operand.hbm [shape: bf16[32,256], index: 4, kind: input, shape index: {}]
  %s5 = inlined_call_operand.hbm [shape: f32[8,512], index: 5, kind: input, shape index: {}]
  %s6 = inlined_call_operand.hbm [shape: f32[8,512], index: 6, kind: output, shape index: {}]
  %s7 = sld [smem:[#allocation0]]
  $region77: #{tpu_custom_call.1} parent=0
    _
  %s9 = ssub.s32 1, %s7
  %s10 = scalar_select 0, %s9, %s7
  %12 = dma.hbm_to_smem %s0, 16, [#allocation3], [#allocation2]
  %s13 = sshll.u32 %s1, 4
  %s14 = int_to_ptr.vmem [resolvable:$true] %s13
  %16 = dma.vmem_to_smem %s14, 16, [#allocation4], [#allocation2]
  %17 = dma.done [#allocation2], 32
  %18 = sfence
  $region1: #{tpu_custom_call.1} parent=0
    #allocation5 [shape = 'u8[32768]{0}', space=vmem, size = 0x8000, scoped, tag = 'input window, operand 3']
    #allocation6 [shape = 's32[2]{0}', space=sflag, size = 0x8, scoped, tag = 'scoped memory for tpu_custom_call.1']
    #allocation7 [shape = 's32[2]{0}', space=sflag, size = 0x8, scoped, tag = 'scoped memory for tpu_custom_call.1']
    #allocation8 [shape = 'u8[32768]{0}', space=vmem, size = 0x8000, scoped, tag = 'input window, operand 4']
    #allocation9 [shape = 's32[2]{0}', space=sflag, size = 0x8, scoped, tag = 'scoped memory for tpu_custom_call.1']
    #allocation10 [shape = 'u8[16384]{0}', space=vmem, size = 0x4000, scoped, tag = 'input window, operand 5']
    #allocation11 [shape = 'u8[16384]{0}', space=vmem, size = 0x4000, scoped, tag = 'output window, operand 0']
    %19 = vsyncpa [#allocation6], 0
    %s20 = scalar_lea.sflag [#allocation6], 1
    %21 = vsyncpa %s20, 0
    %22 = vsyncpa [#allocation9], 0
    %s23 = scalar_lea.sflag [#allocation9], 1
    %24 = vsyncpa %s23, 0
    %25 = vsyncpa [#allocation7], 0
    %s26 = scalar_lea.sflag [#allocation7], 1
    %27 = vsyncpa %s26, 0
    loop: start=0, step=1, limit=4
    $region2: #{tpu_custom_call.1} parent=1 // loop_pre_header
      _
    $region3: #{tpu_custom_call.1} parent=1 // loop_header
      %s29 = sphi 0, %s33
      %p30 = scmp.ge.s32.totalorder %s29, 4
      %s37 = sphi 0, %s37
      %s39 = sphi 0, %s37
      %s40 = sphi 0, %s39
      %s54 = sphi 0, %s40
      %s62 = sphi 0, %s64
      %s65 = sphi 0, %s62
      %s66 = sphi 0, %s65
      %s82 = sphi 0, %s66
      %s90 = sphi 0, %s92
      %s93 = sphi 0, %s90
      %s94 = sphi 0, %s93
      %s110 = sphi 0, %s94
      %s118 = sphi 0, %s120
      %s121 = sphi 0, %s118
      %s122 = sphi 0, %s121
      %s138 = sphi 0, %s122
      %s146 = sphi 0, %s148
      %s149 = sphi 0, %s146
      %s150 = sphi 0, %s149
      %s166 = sphi 0, %s150
    $region4: #{tpu_custom_call.1} parent=1 // loop_header_branch
      %32 = sbr.rel (%p30) target = $region8
    $region5: #{tpu_custom_call.1} parent=1 // loop_body
      %s34 = ssub.s32 %s29, 1
      %s35 = ssub.s32 %s29, 2
      %s36 = sadd.s32 %s29, 1
      %s38 = sadd.s32 %s37, 1
      %p41 = scmp.eq.s32.totalorder %s29, 1
      %p42 = scmp.ne.s32.totalorder %s37, %s39
      %p43 = scmp.eq.s32.totalorder %s29, 0
      %p44 = por %p42, %p43
      %p45 = scmp.ne.s32.totalorder %s37, %s39
      %p46 = scmp.eq.s32.totalorder %s34, 1
      %p47 = por %p45, %p46
      %p48 = scmp.ne.s32.totalorder %s39, %s40
      %p49 = scmp.eq.s32.totalorder %s34, 0
      %p50 = por %p48, %p49
      %p51 = scmp.ne.s32.totalorder %s39, %s40
      %p52 = scmp.eq.s32.totalorder %s35, 1
      %p53 = por %p51, %p52
      %p55 = scmp.ne.s32.totalorder %s40, %s54
      %p56 = scmp.eq.s32.totalorder %s35, 0
      %p57 = por %p55, %p56
      %s58 = sld [smem:[#allocation3 + %s29]]
      %s59 = sld [smem:[#allocation3 + %s36]]
      %s60 = ssub.s32 %s58, %s59
      %p61 = scmp.eq.s32.totalorder %s60, 0
      %s63 = sadd.s32 %s62, 1
      %s64 = scalar_select %p61, %s62, %s63
      %p67 = pneg %p61
      %p68 = scmp.eq.s32.totalorder %s29, 1
      %p69 = por %p67, %p68
      %p70 = scmp.ne.s32.totalorder %s62, %s65
      %p71 = scmp.eq.s32.totalorder %s29, 0
      %p72 = por %p70, %p71
      %p73 = scmp.ne.s32.totalorder %s62, %s65
      %p74 = scmp.eq.s32.totalorder %s34, 1
      %p75 = por %p73, %p74
      %p76 = scmp.ne.s32.totalorder %s65, %s66
      %p77 = scmp.eq.s32.totalorder %s34, 0
      %p78 = por %p76, %p77
      %p79 = scmp.ne.s32.totalorder %s65, %s66
      %p80 = scmp.eq.s32.totalorder %s35, 1
      %p81 = por %p79, %p80
      %p83 = scmp.ne.s32.totalorder %s66, %s82
      %p84 = scmp.eq.s32.totalorder %s35, 0
      %p85 = por %p83, %p84
      %s86 = sld [smem:[#allocation4 + %s29]]
      %s87 = sld [smem:[#allocation4 + %s36]]
      %s88 = ssub.s32 %s86, %s87
      %p89 = scmp.eq.s32.totalorder %s88, 0
      %s91 = sadd.s32 %s90, 1
      %s92 = scalar_select %p89, %s90, %s91
      %p95 = pneg %p89
      %p96 = scmp.eq.s32.totalorder %s29, 1
      %p97 = por %p95, %p96
      %p98 = scmp.ne.s32.totalorder %s90, %s93
      %p99 = scmp.eq.s32.totalorder %s29, 0
      %p100 = por %p98, %p99
      %p101 = scmp.ne.s32.totalorder %s90, %s93
      %p102 = scmp.eq.s32.totalorder %s34, 1
      %p103 = por %p101, %p102
      %p104 = scmp.ne.s32.totalorder %s93, %s94
      %p105 = scmp.eq.s32.totalorder %s34, 0
      %p106 = por %p104, %p105
      %p107 = scmp.ne.s32.totalorder %s93, %s94
      %p108 = scmp.eq.s32.totalorder %s35, 1
      %p109 = por %p107, %p108
      %p111 = scmp.ne.s32.totalorder %s94, %s110
      %p112 = scmp.eq.s32.totalorder %s35, 0
      %p113 = por %p111, %p112
      %s114 = sld [smem:[#allocation3 + %s29]]
      %s115 = sld [smem:[#allocation3 + %s36]]
      %s116 = ssub.s32 %s114, %s115
      %p117 = scmp.eq.s32.totalorder %s116, 0
      %s119 = sadd.s32 %s118, 1
      %s120 = scalar_select %p117, %s118, %s119
      %p123 = pneg %p117
      %p124 = scmp.eq.s32.totalorder %s29, 1
      %p125 = por %p123, %p124
      %p126 = scmp.ne.s32.totalorder %s118, %s121
      %p127 = scmp.eq.s32.totalorder %s29, 0
      %p128 = por %p126, %p127
      %p129 = scmp.ne.s32.totalorder %s118, %s121
      %p130 = scmp.eq.s32.totalorder %s34, 1
      %p131 = por %p129, %p130
      %p132 = scmp.ne.s32.totalorder %s121, %s122
      %p133 = scmp.eq.s32.totalorder %s34, 0
      %p134 = por %p132, %p133
      %p135 = scmp.ne.s32.totalorder %s121, %s122
      %p136 = scmp.eq.s32.totalorder %s35, 1
      %p137 = por %p135, %p136
      %p139 = scmp.ne.s32.totalorder %s122, %s138
      %p140 = scmp.eq.s32.totalorder %s35, 0
      %p141 = por %p139, %p140
      %s142 = sld [smem:[#allocation3 + %s29]]
      %s143 = sld [smem:[#allocation3 + %s36]]
      %s144 = ssub.s32 %s142, %s143
      %p145 = scmp.eq.s32.totalorder %s144, 0
      %s147 = sadd.s32 %s146, 1
      %s148 = scalar_select %p145, %s146, %s147
      %p151 = pneg %p145
      %p152 = scmp.eq.s32.totalorder %s29, 1
      %p153 = por %p151, %p152
      %p154 = scmp.ne.s32.totalorder %s146, %s149
      %p155 = scmp.eq.s32.totalorder %s29, 0
      %p156 = por %p154, %p155
      %p157 = scmp.ne.s32.totalorder %s146, %s149
      %p158 = scmp.eq.s32.totalorder %s34, 1
      %p159 = por %p157, %p158
      %p160 = scmp.ne.s32.totalorder %s149, %s150
      %p161 = scmp.eq.s32.totalorder %s34, 0
      %p162 = por %p160, %p161
      %p163 = scmp.ne.s32.totalorder %s149, %s150
      %p164 = scmp.eq.s32.totalorder %s35, 1
      %p165 = por %p163, %p164
      %p167 = scmp.ne.s32.totalorder %s150, %s166
      %p168 = scmp.eq.s32.totalorder %s35, 0
      %p169 = por %p167, %p168
      %p170 = scmp.le.s32.totalorder 1, %s29
      %p171 = scmp.lt.s32.totalorder %s29, 3
      %p172 = pnand %p170, %p171
      %p173 = pneg %p172
      // Predicated region
      $region9: #{tpu_custom_call.1} parent=5 // pred_check
        _
      $region10: #{tpu_custom_call.1} parent=5 // pred_check_branch
        %175 = sbr.rel (%p172) target = $region12
      $region11: #{tpu_custom_call.1} parent=5 // pred_region
        %s176 = ssub.s32 %s29, 1
        // Predicated region
        $region13: #{tpu_custom_call.1} parent=11 // pred_check
          %p177 = pneg %p50
        $region14: #{tpu_custom_call.1} parent=11 // pred_check_branch
          %179 = sbr.rel (%p177) target = $region16
        $region15: #{tpu_custom_call.1} parent=11 // pred_region
          _
        $region16: #{tpu_custom_call.1} parent=11 // pred_fallthru
          _
      $region12: #{tpu_custom_call.1} parent=5 // pred_fallthru
        _
      %p180 = scmp.lt.s32.totalorder %s29, 2
      // Predicated region
      $region17: #{tpu_custom_call.1} parent=5 // pred_check
        %p181 = pneg %p180
      $region18: #{tpu_custom_call.1} parent=5 // pred_check_branch
        %183 = sbr.rel (%p181) target = $region20
      $region19: #{tpu_custom_call.1} parent=5 // pred_region
        // Predicated region
        $region21: #{tpu_custom_call.1} parent=19 // pred_check
          %p184 = pneg %p72
        $region22: #{tpu_custom_call.1} parent=19 // pred_check_branch
          %186 = sbr.rel (%p184) target = $region24
        $region23: #{tpu_custom_call.1} parent=19 // pred_region
          %s187 = sand.u32 %s62, 1
          %s188 = scalar_lea.sflag [#allocation6], %s187
          %s189 = sand.u32 %s62, 1
          %s190 = smul.addr %s189, 32
          %s191 = scalar_lea.vmem [#allocation5], %s190
          %s192 = sld [smem:[#allocation3 + %s29]]
          %s193 = smul.u32 2, %s192
          %s195 = ssub.s32 512, 512
          %196 = vsyncadd %s188, %s195
          %s197 = smul.addr %s193, 64
          %s198 = scalar_lea.hbm %s3, %s197
          %s199 = sshll.u32 %s191, 4
          %s200 = int_to_ptr.vmem [resolvable:$true] %s199
          %205 = dma.hbm_to_vmem [thread:$0]  %s198, 512, %s200, %s188, 256, 128, 8
        $region24: #{tpu_custom_call.1} parent=19 // pred_fallthru
          _
        // Predicated region
        $region25: #{tpu_custom_call.1} parent=19 // pred_check
          %p206 = pneg %p100
        $region26: #{tpu_custom_call.1} parent=19 // pred_check_branch
          %208 = sbr.rel (%p206) target = $region28
        $region27: #{tpu_custom_call.1} parent=19 // pred_region
          %s209 = sand.u32 %s29, 1
          %s210 = scalar_lea.sflag [#allocation9], %s209
          %s211 = sand.u32 %s90, 1
          %s212 = smul.addr %s211, 32
          %s213 = scalar_lea.vmem [#allocation8], %s212
          %s214 = sld [smem:[#allocation4 + %s29]]
          %s215 = smul.u32 2, %s214
          %s217 = ssub.s32 512, 512
          %218 = vsyncadd %s210, %s217
          %s219 = smul.addr %s215, 64
          %s220 = scalar_lea.hbm %s4, %s219
          %s221 = sshll.u32 %s213, 4
          %s222 = int_to_ptr.vmem [resolvable:$true] %s221
          %227 = dma.hbm_to_vmem [thread:$0]  %s220, 512, %s222, %s210, 128, 128, 8
        $region28: #{tpu_custom_call.1} parent=19 // pred_fallthru
          _
        // Predicated region
        $region29: #{tpu_custom_call.1} parent=19 // pred_check
          %p228 = pneg %p128
        $region30: #{tpu_custom_call.1} parent=19 // pred_check_branch
          %230 = sbr.rel (%p228) target = $region32
        $region31: #{tpu_custom_call.1} parent=19 // pred_region
          %s231 = sand.u32 %s29, 1
          %s232 = scalar_lea.sflag [#allocation9], %s231
          %s233 = sand.u32 %s118, 1
          %s234 = smul.addr %s233, 16
          %s235 = scalar_lea.vmem [#allocation10], %s234
          %s236 = sld [smem:[#allocation3 + %s29]]
          %s237 = smul.u32 2, %s236
          %s239 = ssub.s32 256, 256
          %240 = vsyncadd %s232, %s239
          %s241 = smul.addr %s237, 128
          %s242 = scalar_lea.hbm %s5, %s241
          %s244 = sshll.u32 %s235, 4
          %s245 = int_to_ptr.vmem [resolvable:$true] %s244
          %247 = dma.hbm_to_vmem [thread:$0]  %s242, 256, %s245, %s232
        $region32: #{tpu_custom_call.1} parent=19 // pred_fallthru
          _
      $region20: #{tpu_custom_call.1} parent=5 // pred_fallthru
        _
      %p248 = scmp.le.s32.totalorder 1, %s29
      %p249 = scmp.lt.s32.totalorder %s29, 3
      %p250 = pnand %p248, %p249
      %p251 = pneg %p250
      // Predicated region
      $region33: #{tpu_custom_call.1} parent=5 // pred_check
        _
      $region34: #{tpu_custom_call.1} parent=5 // pred_check_branch
        %253 = sbr.rel (%p250) target = $region36
      $region35: #{tpu_custom_call.1} parent=5 // pred_region
        %s254 = ssub.s32 %s29, 1
        %s255 = sand.u32 %s65, 1
        %s256 = scalar_lea.sflag [#allocation6], %s255
        %s257 = sand.u32 %s65, 1
        %s258 = smul.addr %s257, 32
        %s259 = scalar_lea.vmem [#allocation5], %s258
        // Predicated region
        $region37: #{tpu_custom_call.1} parent=35 // pred_check
          %p260 = pneg %p78
        $region38: #{tpu_custom_call.1} parent=35 // pred_check_branch
          %262 = sbr.rel (%p260) target = $region40
        $region39: #{tpu_custom_call.1} parent=35 // pred_region
          %263 = dma.done %s256, 512
        $region40: #{tpu_custom_call.1} parent=35 // pred_fallthru
          _
        %s264 = sand.u32 %s34, 1
        %s265 = scalar_lea.sflag [#allocation9], %s264
        %s266 = sand.u32 %s93, 1
        %s267 = smul.addr %s266, 32
        %s268 = scalar_lea.vmem [#allocation8], %s267
        // Predicated region
        $region41: #{tpu_custom_call.1} parent=35 // pred_check
          %p269 = pneg %p106
        $region42: #{tpu_custom_call.1} parent=35 // pred_check_branch
          %271 = sbr.rel (%p269) target = $region44
        $region43: #{tpu_custom_call.1} parent=35 // pred_region
          %272 = dma.done %s265, 512
        $region44: #{tpu_custom_call.1} parent=35 // pred_fallthru
          _
        %s273 = sand.u32 %s34, 1
        %s274 = scalar_lea.sflag [#allocation9], %s273
        %s275 = sand.u32 %s121, 1
        %s276 = smul.addr %s275, 16
        %s277 = scalar_lea.vmem [#allocation10], %s276
        // Predicated region
        $region45: #{tpu_custom_call.1} parent=35 // pred_check
          %p278 = pneg %p134
        $region46: #{tpu_custom_call.1} parent=35 // pred_check_branch
          %280 = sbr.rel (%p278) target = $region48
        $region47: #{tpu_custom_call.1} parent=35 // pred_region
          %281 = dma.done %s274, 256
        $region48: #{tpu_custom_call.1} parent=35 // pred_fallthru
          _
        %p282 = pneg %p50
        %p283 = pneg %p47
        %s284 = sand.u32 %s65, 1
        %s285 = scalar_lea.sflag [#allocation6], %s284
        %s286 = sand.u32 %s65, 1
        %s287 = smul.addr %s286, 32
        %s288 = scalar_lea.vmem [#allocation5], %s287
        %p289 = pneg %p78
        %p290 = pneg %p75
        %s291 = sand.u32 %s34, 1
        %s292 = scalar_lea.sflag [#allocation9], %s291
        %s293 = sand.u32 %s93, 1
        %s294 = smul.addr %s293, 32
        %s295 = scalar_lea.vmem [#allocation8], %s294
        %p296 = pneg %p106
        %p297 = pneg %p103
        %s298 = sand.u32 %s34, 1
        %s299 = scalar_lea.sflag [#allocation9], %s298
        %s300 = sand.u32 %s121, 1
        %s301 = smul.addr %s300, 16
        %s302 = scalar_lea.vmem [#allocation10], %s301
        %p303 = pneg %p134
        %p304 = pneg %p131
        %p305 = pneg %p162
        %p306 = pneg %p159
        %s307 = sand.u32 %s149, 1
        %s308 = scalar_lea.sflag [#allocation7], %s307
        %s309 = sand.u32 %s149, 1
        %s310 = smul.addr %s309, 16
        %s311 = scalar_lea.vmem [#allocation11], %s310
        %s312 = sld [smem:[#allocation3 + %s34]]
        %s313 = smul.u32 2, %s312
        %s314 = sld [smem:[#allocation4 + %s34]]
        %s315 = smul.u32 2, %s314
        %s316 = sld [smem:[#allocation3 + %s34]]
        %s317 = smul.u32 2, %s316
        %s318 = sld [smem:[#allocation3 + %s34]]
        %s319 = smul.u32 2, %s318
        %s321 = sld [smem:[#allocation3 + %s34]]
        %p322 = scmp.ge.s32.totalorder %s321, 1
        %v323 = vld [vmem:[%s2] sm:$0xf]
        %v324 = vld [vmem:[%s277] ss:$8 sm:$0x3]
        %s325 = scalar_lea.vmem %s277, 1 [#allocation10]
        %v326 = vld [vmem:[%s325] ss:$8 sm:$0x3]
        %s327 = scalar_lea.vmem %s277, 2 [#allocation10]
        %v328 = vld [vmem:[%s327] ss:$8 sm:$0x3]
        %s329 = scalar_lea.vmem %s277, 3 [#allocation10]
        %v330 = vld [vmem:[%s329] ss:$8 sm:$0x3]
        %v331 = vld [vmem:[%s259] sm:$0xff]
        %v332 = vld [vmem:[%s259 + $0x8] sm:$0xff]
        %v333 = vld [vmem:[%s259 + $0x10] sm:$0xff]
        %v334 = vld [vmem:[%s259 + $0x18] sm:$0xff]
        %v336 = vlaneseq
        %v337 = vshrl.u32 %v336, 7
        %v338 = vsub.s32 0, %v337
        %v339 = vrot.slane %v324, %v338
        %v340 = vlaneseq
        %v341 = vshrl.u32 %v340, 7
        %v342 = vsub.s32 1, %v341
        %v343 = vrot.slane %v324, %v342
        %v350 = vunpack.c.l.b16 %v331
        %v351 = vunpack.c.h.b16 %v331
        %v352 = vunpack.c.l.b16 %v332
        %v353 = vunpack.c.h.b16 %v332
        %v354 = vunpack.c.l.b16 %v333
        %v355 = vunpack.c.h.b16 %v333
        %v356 = vunpack.c.l.b16 %v334
        %v357 = vunpack.c.h.b16 %v334
        %v358 = vpack.c.b16 %v352, %v350
        %v359 = vpack.c.b16 %v353, %v351
        %v360 = vpack.c.b16 %v356, %v354
        %v361 = vpack.c.b16 %v357, %v355
        %vm366 = vcmask 261120
        %v368 = vsel %vm366, %v323, 0
        %370 = vmatprep.subr.bf16.mxu0 %v359
        %371 = vmatpush1.bf16.msra.mxu0 %v358
        %372 = vmatprep.subr.bf16.mxu0 %v361
        %373 = vmatpush1.bf16.msra.mxu0 %v360
        %374 = vmatprep.subr.bf16.mxu0 0
        %375 = vmatpush1.bf16.msra.mxu0 0
        %376 = vmatprep.subr.bf16.mxu0 0
        %377 = vmatpush1.bf16.msra.mxu0 0
        %378 = vmatprep.subr.bf16.mxu0 0
        %379 = vmatpush1.bf16.msra.mxu0 0
        %380 = vmatprep.subr.bf16.mxu0 0
        %381 = vmatpush1.bf16.msra.mxu0 0
        %382 = vmatprep.subr.bf16.mxu0 0
        %383 = vmatpush1.bf16.msra.mxu0 0
        %384 = vmatprep.subr.bf16.mxu0 0
        %385 = vmatpush1.bf16.msra.mxu0 0
        %386 = vmatprep.subr.bf16.mxu0 0
        %387 = vmatpush1.bf16.msra.mxu0 0
        %388 = vmatprep.subr.bf16.mxu0 0
        %389 = vmatpush1.bf16.msra.mxu0 0
        %390 = vmatprep.subr.bf16.mxu0 0
        %391 = vmatpush1.bf16.msra.mxu0 0
        %392 = vmatprep.subr.bf16.mxu0 0
        %393 = vmatpush1.bf16.msra.mxu0 0
        %394 = vmatprep.subr.bf16.mxu0 0
        %395 = vmatpush1.bf16.msra.mxu0 0
        %396 = vmatprep.subr.bf16.mxu0 0
        %397 = vmatpush1.bf16.msra.mxu0 0
        %398 = vmatprep.subr.bf16.mxu0 0
        %399 = vmatpush1.bf16.msra.mxu0 0
        %400 = vmatprep.subr.bf16.mxu0 0
        %401 = vmatpush1.bf16.msra.mxu0 0
        %402 = vmatprep.mubr.bf16.mxu0 0
        %403 = vmatmul.mubr.bf16.gmra.mrb[0].mxu0 %v368
        %v404 = vpop.f32.mrb[0].mxu0
        %v405 = vadd.f32 %v339, %v404
        %v406 = vpop.f32.mrb[0].mxu0
        %v407 = vadd.f32 %v343, %v406
        %v408 = vpop.f32.mrb[0].mxu0
        %v409 = vpop.f32.mrb[0].mxu0
        %410 = vdwg.mxu0
        // Predicated region
        $region49: #{tpu_custom_call.1} parent=35 // pred_check
          %p411 = pneg %p322
        $region50: #{tpu_custom_call.1} parent=35 // pred_check_branch
          %413 = sbr.rel (%p411) target = $region52
        $region51: #{tpu_custom_call.1} parent=35 // pred_region
          %v414 = vmul.bf16 %v323, %v323
          %v415 = vld [vmem:[%s268] sm:$0xff]
          %v416 = vld [vmem:[%s268 + $0x8] sm:$0xff]
          %v417 = vld [vmem:[%s268 + $0x10] sm:$0xff]
          %v418 = vld [vmem:[%s268 + $0x18] sm:$0xff]
          %v420 = vlaneseq
          %v421 = vshrl.u32 %v420, 7
          %v422 = vsub.s32 0, %v421
          %v423 = vrot.slane %v326, %v422
          %v424 = vlaneseq
          %v425 = vshrl.u32 %v424, 7
          %v426 = vsub.s32 1, %v425
          %v427 = vrot.slane %v326, %v426
          %v434 = vunpack.c.l.b16 %v415
          %v435 = vunpack.c.h.b16 %v415
          %v436 = vunpack.c.l.b16 %v416
          %v437 = vunpack.c.h.b16 %v416
          %v438 = vunpack.c.l.b16 %v417
          %v439 = vunpack.c.h.b16 %v417
          %v440 = vunpack.c.l.b16 %v418
          %v441 = vunpack.c.h.b16 %v418
          %v442 = vpack.c.b16 %v436, %v434
          %v443 = vpack.c.b16 %v437, %v435
          %v444 = vpack.c.b16 %v440, %v438
          %v445 = vpack.c.b16 %v441, %v439
          %v451 = vsel %vm366, %v414, 0
          %453 = vmatprep.subr.bf16.mxu0 %v443
          %454 = vmatpush1.bf16.msra.mxu0 %v442
          %455 = vmatprep.subr.bf16.mxu0 %v445
          %456 = vmatpush1.bf16.msra.mxu0 %v444
          %457 = vmatprep.subr.bf16.mxu0 0
          %458 = vmatpush1.bf16.msra.mxu0 0
          %459 = vmatprep.subr.bf16.mxu0 0
          %460 = vmatpush1.bf16.msra.mxu0 0
          %461 = vmatprep.subr.bf16.mxu0 0
          %462 = vmatpush1.bf16.msra.mxu0 0
          %463 = vmatprep.subr.bf16.mxu0 0
          %464 = vmatpush1.bf16.msra.mxu0 0
          %465 = vmatprep.subr.bf16.mxu0 0
          %466 = vmatpush1.bf16.msra.mxu0 0
          %467 = vmatprep.subr.bf16.mxu0 0
          %468 = vmatpush1.bf16.msra.mxu0 0
          %469 = vmatprep.subr.bf16.mxu0 0
          %470 = vmatpush1.bf16.msra.mxu0 0
          %471 = vmatprep.subr.bf16.mxu0 0
          %472 = vmatpush1.bf16.msra.mxu0 0
          %473 = vmatprep.subr.bf16.mxu0 0
          %474 = vmatpush1.bf16.msra.mxu0 0
          %475 = vmatprep.subr.bf16.mxu0 0
          %476 = vmatpush1.bf16.msra.mxu0 0
          %477 = vmatprep.subr.bf16.mxu0 0
          %478 = vmatpush1.bf16.msra.mxu0 0
          %479 = vmatprep.subr.bf16.mxu0 0
          %480 = vmatpush1.bf16.msra.mxu0 0
          %481 = vmatprep.subr.bf16.mxu0 0
          %482 = vmatpush1.bf16.msra.mxu0 0
          %483 = vmatprep.subr.bf16.mxu0 0
          %484 = vmatpush1.bf16.msra.mxu0 0
          %485 = vmatprep.mubr.bf16.mxu0 0
          %486 = vmatmul.mubr.bf16.gmra.mrb[0].mxu0 %v451
          %v487 = vpop.f32.mrb[0].mxu0
          %v488 = vadd.f32 %v423, %v487
          %v489 = vpop.f32.mrb[0].mxu0
          %v490 = vadd.f32 %v427, %v489
          %v491 = vpop.f32.mrb[0].mxu0
          %v492 = vpop.f32.mrb[0].mxu0
          %493 = vdwg.mxu0
          %v494 = vmul.f32 %v405, %v405
          %v495 = vmul.f32 %v407, %v407
          %v496 = vsub.f32 %v494, %v488
          %v497 = vsub.f32 %v495, %v490
        $region52: #{tpu_custom_call.1} parent=35 // pred_fallthru
          %v498 = vphi 0, %v496
          %v499 = vphi 0, %v497
        %p500 = pneg %p322
        // Predicated region
        $region53: #{tpu_custom_call.1} parent=35 // pred_check
          _
        $region54: #{tpu_custom_call.1} parent=35 // pred_check_branch
          %502 = sbr.rel (%p322) target = $region56
        $region55: #{tpu_custom_call.1} parent=35 // pred_region
          _
        $region56: #{tpu_custom_call.1} parent=35 // pred_fallthru
          %v503 = vphi %v498, %v405
          %v504 = vphi %v499, %v407
        %v505 = vrot.slane %v503, 4
        %v506 = vadd.f32 %v503, %v505
        %v507 = vrot.slane %v506, 2
        %v508 = vadd.f32 %v506, %v507
        %v509 = vrot.slane %v508, 1
        %v510 = vadd.f32 %v508, %v509
        %v511 = vrot.slane %v504, 4
        %v512 = vadd.f32 %v504, %v511
        %v513 = vrot.slane %v512, 2
        %v514 = vadd.f32 %v512, %v513
        %v515 = vrot.slane %v514, 1
        %v516 = vadd.f32 %v514, %v515
        %v517 = vrcp.pop 8.0
        %v518 = vmul.f32 %v510, %v517
        %v519 = vmul.f32 %v516, %v517
        %v520 = vsub.f32 %v503, %v518
        %v521 = vsub.f32 %v504, %v519
        %v522 = vmul.f32 %v520, %v520
        %v523 = vmul.f32 %v521, %v521
        %v524 = vrot.slane %v522, 4
        %v525 = vadd.f32 %v522, %v524
        %v526 = vrot.slane %v525, 2
        %v527 = vadd.f32 %v525, %v526
        %v528 = vrot.slane %v527, 1
        %v529 = vadd.f32 %v527, %v528
        %v530 = vrot.slane %v523, 4
        %v531 = vadd.f32 %v523, %v530
        %v532 = vrot.slane %v531, 2
        %v533 = vadd.f32 %v531, %v532
        %v534 = vrot.slane %v533, 1
        %v535 = vadd.f32 %v533, %v534
        %v536 = vmul.f32 %v529, %v517
        %v537 = vmul.f32 %v535, %v517
        %v538 = vadd.f32 %v536, 1e-05
        %v539 = vadd.f32 %v537, 1e-05
        %v540 = vrsqrt.pop %v538
        %v541 = vrsqrt.pop %v539
        %v542 = vmul.f32 %v520, %v540
        %v543 = vmul.f32 %v521, %v541
        %v545 = vlaneseq
        %v546 = vshrl.u32 %v545, 7
        %v547 = vsub.s32 0, %v546
        %v548 = vrot.slane %v328, %v547
        %v549 = vlaneseq
        %v550 = vshrl.u32 %v549, 7
        %v551 = vsub.s32 1, %v550
        %v552 = vrot.slane %v328, %v551
        %v555 = vmul.f32 %v542, %v548
        %v556 = vmul.f32 %v543, %v552
        %v558 = vlaneseq
        %v559 = vshrl.u32 %v558, 7
        %v560 = vsub.s32 0, %v559
        %v561 = vrot.slane %v330, %v560
        %v562 = vlaneseq
        %v563 = vshrl.u32 %v562, 7
        %v564 = vsub.s32 1, %v563
        %v565 = vrot.slane %v330, %v564
        %v568 = vadd.f32 %v555, %v561
        %v569 = vadd.f32 %v556, %v565
        // Predicated region
        $region57: #{tpu_custom_call.1} parent=35 // pred_check
          %p570 = pneg %p322
        $region58: #{tpu_custom_call.1} parent=35 // pred_check_branch
          %572 = sbr.rel (%p570) target = $region60
        $region59: #{tpu_custom_call.1} parent=35 // pred_region
          %v573 = vand.u32 2147483647, %v568
          %v574 = vand.u32 2147483647, %v569
          %v575 = vrot.slane %v573, 4
          %v576 = vmax.f32 %v573, %v575
          %v577 = vrot.slane %v576, 2
          %v578 = vmax.f32 %v576, %v577
          %v579 = vrot.slane %v578, 1
          %v580 = vmax.f32 %v578, %v579
          %v581 = vrot.slane %v574, 4
          %v582 = vmax.f32 %v574, %v581
          %v583 = vrot.slane %v582, 2
          %v584 = vmax.f32 %v582, %v583
          %v585 = vrot.slane %v584, 1
          %v586 = vmax.f32 %v584, %v585
          %v587 = vmax.f32 %v580, 1e-30
          %v588 = vmax.f32 %v586, 1e-30
          %v589 = vrcp.pop %v587
          %v590 = vrcp.pop %v588
          %v591 = vmul.f32 %v568, %v589
          %v592 = vmul.f32 %v569, %v590
        $region60: #{tpu_custom_call.1} parent=35 // pred_fallthru
          %v593 = vphi 0, %v591
          %v594 = vphi 0, %v592
        %p595 = pneg %p322
        // Predicated region
        $region61: #{tpu_custom_call.1} parent=35 // pred_check
          _
        $region62: #{tpu_custom_call.1} parent=35 // pred_check_branch
          %597 = sbr.rel (%p322) target = $region64
        $region63: #{tpu_custom_call.1} parent=35 // pred_region
          _
        $region64: #{tpu_custom_call.1} parent=35 // pred_fallthru
          %v598 = vphi %v593, %v568
          %v599 = vphi %v594, %v569
        %v600 = vmax.f32 %v598, 0.0
        %v601 = vmax.f32 %v599, 0.0
        %602 = vst [vmem:[%s311] sm:$0xff] %v600
        %603 = vst [vmem:[%s311 + $0x8] sm:$0xff] %v601
        %s604 = sand.u32 %s149, 1
        %s605 = scalar_lea.sflag [#allocation7], %s604
        %s606 = sand.u32 %s149, 1
        %s607 = smul.addr %s606, 16
        %s608 = scalar_lea.vmem [#allocation11], %s607
        // Predicated region
        $region65: #{tpu_custom_call.1} parent=35 // pred_check
          %p609 = pneg %p159
        $region66: #{tpu_custom_call.1} parent=35 // pred_check_branch
          %611 = sbr.rel (%p609) target = $region68
        $region67: #{tpu_custom_call.1} parent=35 // pred_region
          %s612 = sld [smem:[#allocation3 + %s34]]
          %s613 = smul.u32 2, %s612
          %s615 = ssub.s32 256, 256
          %616 = vsyncadd %s605, %s615
          %s617 = smul.addr %s613, 128
          %s618 = scalar_lea.hbm %s6, %s617
          %s620 = sshll.u32 %s608, 4
          %s621 = int_to_ptr.vmem [resolvable:$true] %s620
          %623 = dma.vmem_to_hbm [thread:$0]  %s621, 256, %s618, %s605
        $region68: #{tpu_custom_call.1} parent=35 // pred_fallthru
          _
      $region36: #{tpu_custom_call.1} parent=5 // pred_fallthru
        _
      %p624 = scmp.le.s32.totalorder 2, %s29
      // Predicated region
      $region69: #{tpu_custom_call.1} parent=5 // pred_check
        %p625 = pneg %p624
      $region70: #{tpu_custom_call.1} parent=5 // pred_check_branch
        %627 = sbr.rel (%p625) target = $region72
      $region71: #{tpu_custom_call.1} parent=5 // pred_region
        %s628 = ssub.s32 %s29, 2
        // Predicated region
        $region73: #{tpu_custom_call.1} parent=71 // pred_check
          %p629 = pneg %p165
        $region74: #{tpu_custom_call.1} parent=71 // pred_check_branch
          %631 = sbr.rel (%p629) target = $region76
        $region75: #{tpu_custom_call.1} parent=71 // pred_region
          %s632 = sand.u32 %s150, 1
          %s633 = scalar_lea.sflag [#allocation7], %s632
          %s634 = sand.u32 %s150, 1
          %s635 = smul.addr %s634, 16
          %s636 = scalar_lea.vmem [#allocation11], %s635
          %637 = dma.done %s633, 256
        $region76: #{tpu_custom_call.1} parent=71 // pred_fallthru
          _
      $region72: #{tpu_custom_call.1} parent=5 // pred_fallthru
        _
    $region6: #{tpu_custom_call.1} parent=1 // loop_footer
      %s33 = sadd.s32 1, %s29
    $region7: #{tpu_custom_call.1} parent=1 // loop_footer_branch
      %28 = sbr.rel target = $region3
    $region8: #{tpu_custom_call.1} parent=1 // loop_exit
      _
    %638 = vsyncpa [#allocation6], 1
    %s639 = scalar_lea.sflag [#allocation6], 1
    %640 = vsyncpa %s639, 1
    %641 = vsyncpa [#allocation9], 1
    %s642 = scalar_lea.sflag [#allocation9], 1
    %643 = vsyncpa %s642, 1
    %644 = vsyncpa [#allocation7], 1
    %s645 = scalar_lea.sflag [#allocation7], 1
    %646 = vsyncpa %s645, 1

</llo_original>
